<compile_context>
chip_gen: v7x
topology: tpu7x:2x2x1
jax: 0.10.0
libtpu: 0.0.40
codegen_flags: <defaults>
</compile_context>

<pallas_src>
import functools

import jax
import jax.numpy as jnp
from jax import lax
from jax.experimental import pallas as pl
from jax.experimental.pallas import tpu as pltpu


# ------------------------------- Pallas kernel -------------------------------

def _basic_attn_kernel(cs_ref, ss_ref, as_ref,
                       wq_ref, bq_ref, wk_ref, bk_ref, wv_ref, bv_ref,
                       wo_ref, bo_ref, wp_ref, bp_ref,
                       o_ref, *, scale):
    """One batch element: fused QKV projection + attention + out-proj + projection."""

    def lin(x, w_ref, b_ref):
        # x[M, K] @ W[K, N] + b[1, N]   (weights pre-transposed to [in, out])
        return lax.dot_general(x, w_ref[...], (((1,), (0,)), ((), ())),
                               preferred_element_type=jnp.float32) + b_ref[...]

    q = lin(cs_ref[...], wq_ref, bq_ref)          # [Lq, D]
    k = lin(ss_ref[...], wk_ref, bk_ref)          # [S,  D]
    v = lin(as_ref[...], wv_ref, bv_ref)          # [S,  D]

    # single-head scaled dot-product attention, mask = None
    scores = lax.dot_general(q * scale, k, (((1,), (1,)), ((), ())),
                             preferred_element_type=jnp.float32)        # [Lq, S]
    m = jnp.max(scores, axis=-1, keepdims=True)
    e = jnp.exp(scores - m)
    attn = e * pl.reciprocal(jnp.sum(e, axis=-1, keepdims=True), approx=True)
    ctx = jnp.dot(attn, v, preferred_element_type=jnp.float32)          # [Lq, D]

    ctx = lin(ctx, wo_ref, bo_ref)                # attention output projection [Lq, D]
    o_ref[...] = lin(ctx, wp_ref, bp_ref)         # Linear(state_dim, action_dim) [Lq, A]


# --------------------------------- wrapper -----------------------------------

def basic_attn_forward(curr_state, state_set, action_set, params, mask=None):
    # TODO(synk): `mask` is accepted but unused (reference forward() only uses mask=None).
    B, D = curr_state.shape
    S = state_set.shape[1]
    A = params["w_proj"].shape[1]
    scale = 1.0 / (D ** 0.5)                      # nhead=1  ->  head_dim == state_dim

    cs3 = curr_state.reshape(B, 1, D)

    def full(shape):
        return pl.BlockSpec(shape, lambda b: (0,) * len(shape))

    out = pl.pallas_call(
        functools.partial(_basic_attn_kernel, scale=scale),
        out_shape=jax.ShapeDtypeStruct((B, 1, A), jnp.float32),
        grid=(B,),
        in_specs=[
            pl.BlockSpec((None, 1, D), lambda b: (b, 0, 0)),   # curr_state  -> [1, D]
            pl.BlockSpec((None, S, D), lambda b: (b, 0, 0)),   # state_set   -> [S, D]
            pl.BlockSpec((None, S, A), lambda b: (b, 0, 0)),   # action_set  -> [S, A]
            full((D, D)), full((1, D)),                        # Wq, bq
            full((D, D)), full((1, D)),                        # Wk, bk
            full((A, D)), full((1, D)),                        # Wv, bv
            full((D, D)), full((1, D)),                        # Wo, bo
            full((D, A)), full((1, A)),                        # W_proj, b_proj
        ],
        out_specs=pl.BlockSpec((None, 1, A), lambda b: (b, 0, 0)),
        compiler_params=pltpu.CompilerParams(
            dimension_semantics=("parallel",)),
    )(cs3, state_set, action_set,
      params["w_q"], params["b_q"], params["w_k"], params["b_k"],
      params["w_v"], params["b_v"], params["w_o"], params["b_o"],
      params["w_proj"], params["b_proj"])
    return out.reshape(B, A)


# ------------------------------- parameters ----------------------------------

def init_params(key, D, A):
    ks = jax.random.split(key, 10)

    def w(k, in_f, out_f):      # stored [in, out] (pre-transposed vs. torch [out, in])
        bound = 1.0 / (in_f ** 0.5)
        return jax.random.uniform(k, (in_f, out_f), jnp.float32, -bound, bound)

    def b(k, in_f, out_f):
        bound = 1.0 / (in_f ** 0.5)
        return jax.random.uniform(k, (1, out_f), jnp.float32, -bound, bound)

    return dict(
        w_q=w(ks[0], D, D), b_q=b(ks[1], D, D),
        w_k=w(ks[2], D, D), b_k=b(ks[3], D, D),
        w_v=w(ks[4], A, D), b_v=b(ks[5], A, D),
        w_o=w(ks[6], D, D), b_o=b(ks[7], D, D),
        w_proj=w(ks[8], D, A), b_proj=b(ks[9], D, A),
    )


# -------------------------- pure-JAX reference check -------------------------

def _reference_forward(curr_state, state_set, action_set, params):
    D = curr_state.shape[-1]
    q = curr_state @ params["w_q"] + params["b_q"][0]
    k = state_set @ params["w_k"] + params["b_k"][0]
    v = action_set @ params["w_v"] + params["b_v"][0]
    scores = jnp.einsum("bd,bsd->bs", q, k) * (1.0 / (D ** 0.5))
    attn = jax.nn.softmax(scores, axis=-1)
    ctx = jnp.einsum("bs,bsd->bd", attn, v)
    ctx = ctx @ params["w_o"] + params["b_o"][0]
    return ctx @ params["w_proj"] + params["b_proj"][0]


# ----------------------------------- main -------------------------------------

if __name__ == "__main__":
    # batch=2, set_size=8, state_dim=16, action_dim=4
    B, S, D, A = 2, 8, 16, 4

    key = jax.random.PRNGKey(0)
    k_cs, k_ss, k_as, k_p = jax.random.split(key, 4)
    curr_state = jax.random.normal(k_cs, (B, D), jnp.float32)
    state_set = jax.random.normal(k_ss, (B, S, D), jnp.float32)
    action_set = jax.random.normal(k_as, (B, S, A), jnp.float32)
    params = init_params(k_p, D, A)

    fwd = jax.jit(basic_attn_forward)
    out = fwd(curr_state, state_set, action_set, params)
    jax.block_until_ready(out)

    ref = _reference_forward(curr_state, state_set, action_set, params)
    assert out.shape == (B, A)
    assert bool(jnp.all(jnp.isfinite(out)))
    assert bool(jnp.allclose(out, ref, rtol=1e-2, atol=1e-2)), (
        f"max abs err {float(jnp.max(jnp.abs(out - ref)))}")
    print("KERNEL_OK")
</pallas_src>

<mosaic_0001>
module attributes {stable_mosaic.version = 11 : i64} {
  func.func @_basic_attn_kernel(%arg0: i32, %arg1: memref<1x1x16xf32, #tpu.memory_space<vmem>>, %arg2: memref<1x8x16xf32, #tpu.memory_space<vmem>>, %arg3: memref<1x8x4xf32, #tpu.memory_space<vmem>>, %arg4: memref<16x16xf32, #tpu.memory_space<vmem>>, %arg5: memref<1x16xf32, #tpu.memory_space<vmem>>, %arg6: memref<16x16xf32, #tpu.memory_space<vmem>>, %arg7: memref<1x16xf32, #tpu.memory_space<vmem>>, %arg8: memref<4x16xf32, #tpu.memory_space<vmem>>, %arg9: memref<1x16xf32, #tpu.memory_space<vmem>>, %arg10: memref<16x16xf32, #tpu.memory_space<vmem>>, %arg11: memref<1x16xf32, #tpu.memory_space<vmem>>, %arg12: memref<16x4xf32, #tpu.memory_space<vmem>>, %arg13: memref<1x4xf32, #tpu.memory_space<vmem>>, %arg14: memref<1x1x4xf32, #tpu.memory_space<vmem>>) attributes {dimension_semantics = [#tpu.dimension_semantics<parallel>], iteration_bounds = array<i64: 2>, scalar_prefetch = 0 : i64, scratch_operands = 0 : i64, tpu.core_type = #tpu.core_type<tc>, window_params = [{transform_indices = @transform_0, window_bounds = array<i64: 1, 1, 16>}, {transform_indices = @transform_1, window_bounds = array<i64: 1, 8, 16>}, {transform_indices = @transform_2, window_bounds = array<i64: 1, 8, 4>}, {pipeline_mode = #tpu.pipeline_mode<synchronous>, transform_indices = @transform_3, window_bounds = array<i64: 16, 16>}, {pipeline_mode = #tpu.pipeline_mode<synchronous>, transform_indices = @transform_4, window_bounds = array<i64: 1, 16>}, {pipeline_mode = #tpu.pipeline_mode<synchronous>, transform_indices = @transform_5, window_bounds = array<i64: 16, 16>}, {pipeline_mode = #tpu.pipeline_mode<synchronous>, transform_indices = @transform_6, window_bounds = array<i64: 1, 16>}, {pipeline_mode = #tpu.pipeline_mode<synchronous>, transform_indices = @transform_7, window_bounds = array<i64: 4, 16>}, {pipeline_mode = #tpu.pipeline_mode<synchronous>, transform_indices = @transform_8, window_bounds = array<i64: 1, 16>}, {pipeline_mode = #tpu.pipeline_mode<synchronous>, transform_indices = @transform_9, window_bounds = array<i64: 16, 16>}, {pipeline_mode = #tpu.pipeline_mode<synchronous>, transform_indices = @transform_10, window_bounds = array<i64: 1, 16>}, {pipeline_mode = #tpu.pipeline_mode<synchronous>, transform_indices = @transform_11, window_bounds = array<i64: 16, 4>}, {pipeline_mode = #tpu.pipeline_mode<synchronous>, transform_indices = @transform_12, window_bounds = array<i64: 1, 4>}, {transform_indices = @transform_13, window_bounds = array<i64: 1, 1, 4>}]} {
    %c0 = arith.constant 0 : index
    %c0_0 = arith.constant 0 : index
    %c0_1 = arith.constant 0 : index
    %0 = vector.load %arg1[%c0, %c0_0, %c0_1] : memref<1x1x16xf32, #tpu.memory_space<vmem>>, vector<1x1x16xf32>
    %1 = vector.shape_cast %0 : vector<1x1x16xf32> to vector<1x16xf32>
    %c0_2 = arith.constant 0 : index
    %c0_3 = arith.constant 0 : index
    %2 = vector.load %arg4[%c0_2, %c0_3] : memref<16x16xf32, #tpu.memory_space<vmem>>, vector<16x16xf32>
    %cst = arith.constant dense<0.000000e+00> : vector<1x16xf32>
    %3 = tpu.matmul %1, %2, %cst {dimension_numbers = #tpu.dot_dimension_numbers<[1], [0], [0], [1], [0, 0, 1, 1], [], []>} : vector<1x16xf32>, vector<16x16xf32>, vector<1x16xf32> -> vector<1x16xf32>
    %c0_4 = arith.constant 0 : index
    %c0_5 = arith.constant 0 : index
    %4 = vector.load %arg5[%c0_4, %c0_5] : memref<1x16xf32, #tpu.memory_space<vmem>>, vector<1x16xf32>
    %5 = arith.addf %3, %4 : vector<1x16xf32>
    %c0_6 = arith.constant 0 : index
    %c0_7 = arith.constant 0 : index
    %c0_8 = arith.constant 0 : index
    %6 = vector.load %arg2[%c0_6, %c0_7, %c0_8] : memref<1x8x16xf32, #tpu.memory_space<vmem>>, vector<1x8x16xf32>
    %7 = vector.shape_cast %6 : vector<1x8x16xf32> to vector<8x16xf32>
    %c0_9 = arith.constant 0 : index
    %c0_10 = arith.constant 0 : index
    %8 = vector.load %arg6[%c0_9, %c0_10] : memref<16x16xf32, #tpu.memory_space<vmem>>, vector<16x16xf32>
    %cst_11 = arith.constant dense<0.000000e+00> : vector<8x16xf32>
    %9 = tpu.matmul %7, %8, %cst_11 {dimension_numbers = #tpu.dot_dimension_numbers<[1], [0], [0], [1], [0, 0, 1, 1], [], []>} : vector<8x16xf32>, vector<16x16xf32>, vector<8x16xf32> -> vector<8x16xf32>
    %c0_12 = arith.constant 0 : index
    %c0_13 = arith.constant 0 : index
    %10 = vector.load %arg7[%c0_12, %c0_13] : memref<1x16xf32, #tpu.memory_space<vmem>>, vector<1x16xf32>
    %11 = vector.broadcast %10 : vector<1x16xf32> to vector<8x16xf32>
    %12 = arith.addf %9, %11 : vector<8x16xf32>
    %c0_14 = arith.constant 0 : index
    %c0_15 = arith.constant 0 : index
    %c0_16 = arith.constant 0 : index
    %13 = vector.load %arg3[%c0_14, %c0_15, %c0_16] : memref<1x8x4xf32, #tpu.memory_space<vmem>>, vector<1x8x4xf32>
    %14 = vector.shape_cast %13 : vector<1x8x4xf32> to vector<8x4xf32>
    %c0_17 = arith.constant 0 : index
    %c0_18 = arith.constant 0 : index
    %15 = vector.load %arg8[%c0_17, %c0_18] : memref<4x16xf32, #tpu.memory_space<vmem>>, vector<4x16xf32>
    %cst_19 = arith.constant dense<0.000000e+00> : vector<8x16xf32>
    %16 = tpu.matmul %14, %15, %cst_19 {dimension_numbers = #tpu.dot_dimension_numbers<[1], [0], [0], [1], [0, 0, 1, 1], [], []>} : vector<8x4xf32>, vector<4x16xf32>, vector<8x16xf32> -> vector<8x16xf32>
    %c0_20 = arith.constant 0 : index
    %c0_21 = arith.constant 0 : index
    %17 = vector.load %arg9[%c0_20, %c0_21] : memref<1x16xf32, #tpu.memory_space<vmem>>, vector<1x16xf32>
    %18 = vector.broadcast %17 : vector<1x16xf32> to vector<8x16xf32>
    %19 = arith.addf %16, %18 : vector<8x16xf32>
    %cst_22 = arith.constant 2.500000e-01 : f32
    %20 = vector.broadcast %cst_22 : f32 to vector<1x16xf32>
    %21 = arith.mulf %5, %20 : vector<1x16xf32>
    %cst_23 = arith.constant dense<0.000000e+00> : vector<1x8xf32>
    %22 = tpu.matmul %21, %12, %cst_23 {dimension_numbers = #tpu.dot_dimension_numbers<[1], [1], [0], [0], [0, 0, 1, 0], [], []>} : vector<1x16xf32>, vector<8x16xf32>, vector<1x8xf32> -> vector<1x8xf32>
    %cst_24 = arith.constant dense<0xFF800000> : vector<1xf32>
    %23 = vector.multi_reduction <maximumf>, %22, %cst_24 [1] : vector<1x8xf32> to vector<1xf32>
    %24 = vector.shape_cast %23 : vector<1xf32> to vector<1x1xf32>
    %25 = vector.broadcast %24 : vector<1x1xf32> to vector<1x8xf32>
    %26 = arith.subf %22, %25 : vector<1x8xf32>
    %27 = math.exp %26 : vector<1x8xf32>
    %cst_25 = arith.constant dense<0.000000e+00> : vector<1xf32>
    %28 = vector.multi_reduction <add>, %27, %cst_25 [1] : vector<1x8xf32> to vector<1xf32>
    %29 = vector.shape_cast %28 : vector<1xf32> to vector<1x1xf32>
    %30 = tpu.reciprocal %29 {approx = true} : vector<1x1xf32> -> vector<1x1xf32>
    %31 = vector.broadcast %30 : vector<1x1xf32> to vector<1x8xf32>
    %32 = arith.mulf %27, %31 : vector<1x8xf32>
    %cst_26 = arith.constant dense<0.000000e+00> : vector<1x16xf32>
    %33 = tpu.matmul %32, %19, %cst_26 {dimension_numbers = #tpu.dot_dimension_numbers<[1], [0], [0], [1], [0, 0, 1, 1], [], []>} : vector<1x8xf32>, vector<8x16xf32>, vector<1x16xf32> -> vector<1x16xf32>
    %c0_27 = arith.constant 0 : index
    %c0_28 = arith.constant 0 : index
    %34 = vector.load %arg10[%c0_27, %c0_28] : memref<16x16xf32, #tpu.memory_space<vmem>>, vector<16x16xf32>
    %cst_29 = arith.constant dense<0.000000e+00> : vector<1x16xf32>
    %35 = tpu.matmul %33, %34, %cst_29 {dimension_numbers = #tpu.dot_dimension_numbers<[1], [0], [0], [1], [0, 0, 1, 1], [], []>} : vector<1x16xf32>, vector<16x16xf32>, vector<1x16xf32> -> vector<1x16xf32>
    %c0_30 = arith.constant 0 : index
    %c0_31 = arith.constant 0 : index
    %36 = vector.load %arg11[%c0_30, %c0_31] : memref<1x16xf32, #tpu.memory_space<vmem>>, vector<1x16xf32>
    %37 = arith.addf %35, %36 : vector<1x16xf32>
    %c0_32 = arith.constant 0 : index
    %c0_33 = arith.constant 0 : index
    %38 = vector.load %arg12[%c0_32, %c0_33] : memref<16x4xf32, #tpu.memory_space<vmem>>, vector<16x4xf32>
    %cst_34 = arith.constant dense<0.000000e+00> : vector<1x4xf32>
    %39 = tpu.matmul %37, %38, %cst_34 {dimension_numbers = #tpu.dot_dimension_numbers<[1], [0], [0], [1], [0, 0, 1, 1], [], []>} : vector<1x16xf32>, vector<16x4xf32>, vector<1x4xf32> -> vector<1x4xf32>
    %c0_35 = arith.constant 0 : index
    %c0_36 = arith.constant 0 : index
    %40 = vector.load %arg13[%c0_35, %c0_36] : memref<1x4xf32, #tpu.memory_space<vmem>>, vector<1x4xf32>
    %41 = arith.addf %39, %40 : vector<1x4xf32>
    %c0_37 = arith.constant 0 : index
    %c0_38 = arith.constant 0 : index
    %c0_39 = arith.constant 0 : index
    %42 = vector.load %arg14[%c0_37, %c0_38, %c0_39] : memref<1x1x4xf32, #tpu.memory_space<vmem>>, vector<1x1x4xf32>
    %43 = vector.shape_cast %42 : vector<1x1x4xf32> to vector<1x4xf32>
    %44 = vector.shape_cast %41 : vector<1x4xf32> to vector<1x1x4xf32>
    tpu.vector_store %arg14[%c0_37, %c0_38, %c0_39], %44 {strides = array<i32>} : memref<1x1x4xf32, #tpu.memory_space<vmem>>, vector<1x1x4xf32>,
    return
  }
  func.func @transform_0(%arg0: i32) -> (i32, i32, i32) {
    %c0_i32 = arith.constant 0 : i32
    %c0_i32_0 = arith.constant 0 : i32
    %c0_i32_1 = arith.constant 0 : i32
    return %arg0, %c0_i32, %c0_i32_0 : i32, i32, i32
  }
  func.func @transform_1(%arg0: i32) -> (i32, i32, i32) {
    %c0_i32 = arith.constant 0 : i32
    %c0_i32_0 = arith.constant 0 : i32
    %c0_i32_1 = arith.constant 0 : i32
    return %arg0, %c0_i32, %c0_i32_0 : i32, i32, i32
  }
  func.func @transform_2(%arg0: i32) -> (i32, i32, i32) {
    %c0_i32 = arith.constant 0 : i32
    %c0_i32_0 = arith.constant 0 : i32
    %c0_i32_1 = arith.constant 0 : i32
    return %arg0, %c0_i32, %c0_i32_0 : i32, i32, i32
  }
  func.func @transform_3(%arg0: i32) -> (i32, i32) {
    %c0_i32 = arith.constant 0 : i32
    %c0_i32_0 = arith.constant 0 : i32
    %c0_i32_1 = arith.constant 0 : i32
    return %c0_i32, %c0_i32_0 : i32, i32
  }
  func.func @transform_4(%arg0: i32) -> (i32, i32) {
    %c0_i32 = arith.constant 0 : i32
    %c0_i32_0 = arith.constant 0 : i32
    %c0_i32_1 = arith.constant 0 : i32
    return %c0_i32, %c0_i32_0 : i32, i32
  }
  func.func @transform_5(%arg0: i32) -> (i32, i32) {
    %c0_i32 = arith.constant 0 : i32
    %c0_i32_0 = arith.constant 0 : i32
    %c0_i32_1 = arith.constant 0 : i32
    return %c0_i32, %c0_i32_0 : i32, i32
  }
  func.func @transform_6(%arg0: i32) -> (i32, i32) {
    %c0_i32 = arith.constant 0 : i32
    %c0_i32_0 = arith.constant 0 : i32
    %c0_i32_1 = arith.constant 0 : i32
    return %c0_i32, %c0_i32_0 : i32, i32
  }
  func.func @transform_7(%arg0: i32) -> (i32, i32) {
    %c0_i32 = arith.constant 0 : i32
    %c0_i32_0 = arith.constant 0 : i32
    %c0_i32_1 = arith.constant 0 : i32
    return %c0_i32, %c0_i32_0 : i32, i32
  }
  func.func @transform_8(%arg0: i32) -> (i32, i32) {
    %c0_i32 = arith.constant 0 : i32
    %c0_i32_0 = arith.constant 0 : i32
    %c0_i32_1 = arith.constant 0 : i32
    return %c0_i32, %c0_i32_0 : i32, i32
  }
  func.func @transform_9(%arg0: i32) -> (i32, i32) {
    %c0_i32 = arith.constant 0 : i32
    %c0_i32_0 = arith.constant 0 : i32
    %c0_i32_1 = arith.constant 0 : i32
    return %c0_i32, %c0_i32_0 : i32, i32
  }
  func.func @transform_10(%arg0: i32) -> (i32, i32) {
    %c0_i32 = arith.constant 0 : i32
    %c0_i32_0 = arith.constant 0 : i32
    %c0_i32_1 = arith.constant 0 : i32
    return %c0_i32, %c0_i32_0 : i32, i32
  }
  func.func @transform_11(%arg0: i32) -> (i32, i32) {
    %c0_i32 = arith.constant 0 : i32
    %c0_i32_0 = arith.constant 0 : i32
    %c0_i32_1 = arith.constant 0 : i32
    return %c0_i32, %c0_i32_0 : i32, i32
  }
  func.func @transform_12(%arg0: i32) -> (i32, i32) {
    %c0_i32 = arith.constant 0 : i32
    %c0_i32_0 = arith.constant 0 : i32
    %c0_i32_1 = arith.constant 0 : i32
    return %c0_i32, %c0_i32_0 : i32, i32
  }
  func.func @transform_13(%arg0: i32) -> (i32, i32, i32) {
    %c0_i32 = arith.constant 0 : i32
    %c0_i32_0 = arith.constant 0 : i32
    %c0_i32_1 = arith.constant 0 : i32
    return %arg0, %c0_i32, %c0_i32_0 : i32, i32, i32
  }
}

</mosaic_0001>

<llo_original>
// kernel: basic_attn_forward.1
$region0: #{basic_attn_forward.1}
  #allocation0 [shape = 'u32[]', space=smem, size = 0x4, offset = 0x4, fixed_abs, tag = 'smem constant byte address 0x4 - core index']
  #allocation1 [shape = 'u32[144,128]{1,0:T(1,128)}', space=vmem, size = 0x12000, scoped, tag = 'internal scratch']
  %s0 = inlined_call_operand.vmem [shape: f32[2,1,16], index: 0, kind: input, shape index: {}]
  %s1 = inlined_call_operand.vmem [shape: f32[2,8,16], index: 1, kind: input, shape index: {}]
  %s2 = inlined_call_operand.vmem [shape: f32[2,8,4], index: 2, kind: input, shape index: {}]
  %s3 = inlined_call_operand.vmem [shape: f32[16,16], index: 3, kind: input, shape index: {}]
  %s4 = inlined_call_operand.hbm [shape: f32[1,16], index: 4, kind: input, shape index: {}]
  %s5 = inlined_call_operand.vmem [shape: f32[16,16], index: 5, kind: input, shape index: {}]
  %s6 = inlined_call_operand.hbm [shape: f32[1,16], index: 6, kind: input, shape index: {}]
  %s7 = inlined_call_operand.vmem [shape: f32[4,16], index: 7, kind: input, shape index: {}]
  %s8 = inlined_call_operand.hbm [shape: f32[1,16], index: 8, kind: input, shape index: {}]
  %s9 = inlined_call_operand.vmem [shape: f32[16,16], index: 9, kind: input, shape index: {}]
  %s10 = inlined_call_operand.hbm [shape: f32[1,16], index: 10, kind: input, shape index: {}]
  %s11 = inlined_call_operand.vmem [shape: f32[16,4], index: 11, kind: input, shape index: {}]
  %s12 = inlined_call_operand.hbm [shape: f32[1,4], index: 12, kind: input, shape index: {}]
  %s13 = inlined_call_operand.hbm [shape: f32[2,1,4], index: 13, kind: output, shape index: {}]
  %s14 = sld [smem:[#allocation0]]
  $region105: #{basic_attn_forward.1} parent=0
    _
  %s16 = ssub.s32 1, %s14
  %s17 = scalar_select 0, %s16, %s14
  $region1: #{basic_attn_forward.1} parent=0
    #allocation2 [shape = 'u8[512]{0}', space=vmem, size = 0x400, scoped, tag = 'input window, operand 4, single buffered']
    #allocation3 [shape = 's32[2]{0}', space=sflag, size = 0x8, scoped, tag = 'scoped memory for basic_attn_forward.1']
    #allocation4 [shape = 's32[2]{0}', space=sflag, size = 0x8, scoped, tag = 'scoped memory for basic_attn_forward.1']
    #allocation5 [shape = 'u8[512]{0}', space=vmem, size = 0x400, scoped, tag = 'input window, operand 6, single buffered']
    #allocation6 [shape = 's32[1]{0}', space=sflag, size = 0x4, scoped, tag = 'scoped memory for basic_attn_forward.1']
    #allocation7 [shape = 'u8[512]{0}', space=vmem, size = 0x400, scoped, tag = 'input window, operand 8, single buffered']
    #allocation8 [shape = 'u8[512]{0}', space=vmem, size = 0x400, scoped, tag = 'input window, operand 10, single buffered']
    #allocation9 [shape = 's32[1]{0}', space=sflag, size = 0x4, scoped, tag = 'scoped memory for basic_attn_forward.1']
    #allocation10 [shape = 'u8[512]{0}', space=vmem, size = 0x400, scoped, tag = 'input window, operand 12, single buffered']
    #allocation11 [shape = 'u8[1024]{0}', space=vmem, size = 0x400, scoped, tag = 'output window, operand 0']
    %18 = vsyncpa [#allocation3], 0
    %19 = vsyncpa [#allocation6], 0
    %20 = vsyncpa [#allocation9], 0
    %21 = vsyncpa [#allocation4], 0
    %s22 = scalar_lea.sflag [#allocation4], 1
    %23 = vsyncpa %s22, 0
    loop: start=0, step=1, limit=4
    $region2: #{basic_attn_forward.1} parent=1 // loop_pre_header
      _
    $region3: #{basic_attn_forward.1} parent=1 // loop_header
      %s25 = sphi 0, %s29
      %p26 = scmp.ge.s32.totalorder %s25, 4
      %s35 = sphi 0, %s37
      %s38 = sphi 0, %s35
      %s39 = sphi 0, %s38
      %s55 = sphi 0, %s39
      %s61 = sphi 0, %s63
      %s64 = sphi 0, %s61
      %s65 = sphi 0, %s64
      %s81 = sphi 0, %s65
      %s87 = sphi 0, %s89
      %s90 = sphi 0, %s87
      %s91 = sphi 0, %s90
      %s107 = sphi 0, %s91
      %s111 = sphi 0, %s111
      %s113 = sphi 0, %s111
      %s114 = sphi 0, %s113
      %s128 = sphi 0, %s114
      %s132 = sphi 0, %s132
      %s134 = sphi 0, %s132
      %s135 = sphi 0, %s134
      %s149 = sphi 0, %s135
      %s153 = sphi 0, %s153
      %s155 = sphi 0, %s153
      %s156 = sphi 0, %s155
      %s170 = sphi 0, %s156
      %s174 = sphi 0, %s174
      %s176 = sphi 0, %s174
      %s177 = sphi 0, %s176
      %s191 = sphi 0, %s177
      %s195 = sphi 0, %s195
      %s197 = sphi 0, %s195
      %s198 = sphi 0, %s197
      %s212 = sphi 0, %s198
      %s216 = sphi 0, %s216
      %s218 = sphi 0, %s216
      %s219 = sphi 0, %s218
      %s233 = sphi 0, %s219
      %s237 = sphi 0, %s237
      %s239 = sphi 0, %s237
      %s240 = sphi 0, %s239
      %s254 = sphi 0, %s240
      %s258 = sphi 0, %s258
      %s260 = sphi 0, %s258
      %s261 = sphi 0, %s260
      %s275 = sphi 0, %s261
      %s279 = sphi 0, %s279
      %s281 = sphi 0, %s279
      %s282 = sphi 0, %s281
      %s296 = sphi 0, %s282
      %s300 = sphi 0, %s300
      %s302 = sphi 0, %s300
      %s303 = sphi 0, %s302
      %s317 = sphi 0, %s303
      %s323 = sphi 0, %s325
      %s326 = sphi 0, %s323
      %s327 = sphi 0, %s326
      %s343 = sphi 0, %s327
    $region4: #{basic_attn_forward.1} parent=1 // loop_header_branch
      %28 = sbr.rel (%p26) target = $region8
    $region5: #{basic_attn_forward.1} parent=1 // loop_body
      %s30 = ssub.s32 %s25, 1
      %s31 = ssub.s32 %s25, 2
      %s32 = sadd.s32 %s25, 1
      %s33 = ssub.s32 %s25, %s32
      %p34 = scmp.eq.s32.totalorder %s33, 0
      %s36 = sadd.s32 %s35, 1
      %s37 = scalar_select %p34, %s35, %s36
      %p40 = pneg %p34
      %p41 = scmp.eq.s32.totalorder %s25, 1
      %p42 = por %p40, %p41
      %p43 = scmp.ne.s32.totalorder %s35, %s38
      %p44 = scmp.eq.s32.totalorder %s25, 0
      %p45 = por %p43, %p44
      %p46 = scmp.ne.s32.totalorder %s35, %s38
      %p47 = scmp.eq.s32.totalorder %s30, 1
      %p48 = por %p46, %p47
      %p49 = scmp.ne.s32.totalorder %s38, %s39
      %p50 = scmp.eq.s32.totalorder %s30, 0
      %p51 = por %p49, %p50
      %p52 = scmp.ne.s32.totalorder %s38, %s39
      %p53 = scmp.eq.s32.totalorder %s31, 1
      %p54 = por %p52, %p53
      %p56 = scmp.ne.s32.totalorder %s39, %s55
      %p57 = scmp.eq.s32.totalorder %s31, 0
      %p58 = por %p56, %p57
      %s59 = ssub.s32 %s25, %s32
      %p60 = scmp.eq.s32.totalorder %s59, 0
      %s62 = sadd.s32 %s61, 1
      %s63 = scalar_select %p60, %s61, %s62
      %p66 = pneg %p60
      %p67 = scmp.eq.s32.totalorder %s25, 1
      %p68 = por %p66, %p67
      %p69 = scmp.ne.s32.totalorder %s61, %s64
      %p70 = scmp.eq.s32.totalorder %s25, 0
      %p71 = por %p69, %p70
      %p72 = scmp.ne.s32.totalorder %s61, %s64
      %p73 = scmp.eq.s32.totalorder %s30, 1
      %p74 = por %p72, %p73
      %p75 = scmp.ne.s32.totalorder %s64, %s65
      %p76 = scmp.eq.s32.totalorder %s30, 0
      %p77 = por %p75, %p76
      %p78 = scmp.ne.s32.totalorder %s64, %s65
      %p79 = scmp.eq.s32.totalorder %s31, 1
      %p80 = por %p78, %p79
      %p82 = scmp.ne.s32.totalorder %s65, %s81
      %p83 = scmp.eq.s32.totalorder %s31, 0
      %p84 = por %p82, %p83
      %s85 = ssub.s32 %s25, %s32
      %p86 = scmp.eq.s32.totalorder %s85, 0
      %s88 = sadd.s32 %s87, 1
      %s89 = scalar_select %p86, %s87, %s88
      %p92 = pneg %p86
      %p93 = scmp.eq.s32.totalorder %s25, 1
      %p94 = por %p92, %p93
      %p95 = scmp.ne.s32.totalorder %s87, %s90
      %p96 = scmp.eq.s32.totalorder %s25, 0
      %p97 = por %p95, %p96
      %p98 = scmp.ne.s32.totalorder %s87, %s90
      %p99 = scmp.eq.s32.totalorder %s30, 1
      %p100 = por %p98, %p99
      %p101 = scmp.ne.s32.totalorder %s90, %s91
      %p102 = scmp.eq.s32.totalorder %s30, 0
      %p103 = por %p101, %p102
      %p104 = scmp.ne.s32.totalorder %s90, %s91
      %p105 = scmp.eq.s32.totalorder %s31, 1
      %p106 = por %p104, %p105
      %p108 = scmp.ne.s32.totalorder %s91, %s107
      %p109 = scmp.eq.s32.totalorder %s31, 0
      %p110 = por %p108, %p109
      %s112 = sadd.s32 %s111, 1
      %p115 = scmp.eq.s32.totalorder %s25, 1
      %p116 = scmp.ne.s32.totalorder %s111, %s113
      %p117 = scmp.eq.s32.totalorder %s25, 0
      %p118 = por %p116, %p117
      %p119 = scmp.ne.s32.totalorder %s111, %s113
      %p120 = scmp.eq.s32.totalorder %s30, 1
      %p121 = por %p119, %p120
      %p122 = scmp.ne.s32.totalorder %s113, %s114
      %p123 = scmp.eq.s32.totalorder %s30, 0
      %p124 = por %p122, %p123
      %p125 = scmp.ne.s32.totalorder %s113, %s114
      %p126 = scmp.eq.s32.totalorder %s31, 1
      %p127 = por %p125, %p126
      %p129 = scmp.ne.s32.totalorder %s114, %s128
      %p130 = scmp.eq.s32.totalorder %s31, 0
      %p131 = por %p129, %p130
      %s133 = sadd.s32 %s132, 1
      %p136 = scmp.eq.s32.totalorder %s25, 1
      %p137 = scmp.ne.s32.totalorder %s132, %s134
      %p138 = scmp.eq.s32.totalorder %s25, 0
      %p139 = por %p137, %p138
      %p140 = scmp.ne.s32.totalorder %s132, %s134
      %p141 = scmp.eq.s32.totalorder %s30, 1
      %p142 = por %p140, %p141
      %p143 = scmp.ne.s32.totalorder %s134, %s135
      %p144 = scmp.eq.s32.totalorder %s30, 0
      %p145 = por %p143, %p144
      %p146 = scmp.ne.s32.totalorder %s134, %s135
      %p147 = scmp.eq.s32.totalorder %s31, 1
      %p148 = por %p146, %p147
      %p150 = scmp.ne.s32.totalorder %s135, %s149
      %p151 = scmp.eq.s32.totalorder %s31, 0
      %p152 = por %p150, %p151
      %s154 = sadd.s32 %s153, 1
      %p157 = scmp.eq.s32.totalorder %s25, 1
      %p158 = scmp.ne.s32.totalorder %s153, %s155
      %p159 = scmp.eq.s32.totalorder %s25, 0
      %p160 = por %p158, %p159
      %p161 = scmp.ne.s32.totalorder %s153, %s155
      %p162 = scmp.eq.s32.totalorder %s30, 1
      %p163 = por %p161, %p162
      %p164 = scmp.ne.s32.totalorder %s155, %s156
      %p165 = scmp.eq.s32.totalorder %s30, 0
      %p166 = por %p164, %p165
      %p167 = scmp.ne.s32.totalorder %s155, %s156
      %p168 = scmp.eq.s32.totalorder %s31, 1
      %p169 = por %p167, %p168
      %p171 = scmp.ne.s32.totalorder %s156, %s170
      %p172 = scmp.eq.s32.totalorder %s31, 0
      %p173 = por %p171, %p172
      %s175 = sadd.s32 %s174, 1
      %p178 = scmp.eq.s32.totalorder %s25, 1
      %p179 = scmp.ne.s32.totalorder %s174, %s176
      %p180 = scmp.eq.s32.totalorder %s25, 0
      %p181 = por %p179, %p180
      %p182 = scmp.ne.s32.totalorder %s174, %s176
      %p183 = scmp.eq.s32.totalorder %s30, 1
      %p184 = por %p182, %p183
      %p185 = scmp.ne.s32.totalorder %s176, %s177
      %p186 = scmp.eq.s32.totalorder %s30, 0
      %p187 = por %p185, %p186
      %p188 = scmp.ne.s32.totalorder %s176, %s177
      %p189 = scmp.eq.s32.totalorder %s31, 1
      %p190 = por %p188, %p189
      %p192 = scmp.ne.s32.totalorder %s177, %s191
      %p193 = scmp.eq.s32.totalorder %s31, 0
      %p194 = por %p192, %p193
      %s196 = sadd.s32 %s195, 1
      %p199 = scmp.eq.s32.totalorder %s25, 1
      %p200 = scmp.ne.s32.totalorder %s195, %s197
      %p201 = scmp.eq.s32.totalorder %s25, 0
      %p202 = por %p200, %p201
      %p203 = scmp.ne.s32.totalorder %s195, %s197
      %p204 = scmp.eq.s32.totalorder %s30, 1
      %p205 = por %p203, %p204
      %p206 = scmp.ne.s32.totalorder %s197, %s198
      %p207 = scmp.eq.s32.totalorder %s30, 0
      %p208 = por %p206, %p207
      %p209 = scmp.ne.s32.totalorder %s197, %s198
      %p210 = scmp.eq.s32.totalorder %s31, 1
      %p211 = por %p209, %p210
      %p213 = scmp.ne.s32.totalorder %s198, %s212
      %p214 = scmp.eq.s32.totalorder %s31, 0
      %p215 = por %p213, %p214
      %s217 = sadd.s32 %s216, 1
      %p220 = scmp.eq.s32.totalorder %s25, 1
      %p221 = scmp.ne.s32.totalorder %s216, %s218
      %p222 = scmp.eq.s32.totalorder %s25, 0
      %p223 = por %p221, %p222
      %p224 = scmp.ne.s32.totalorder %s216, %s218
      %p225 = scmp.eq.s32.totalorder %s30, 1
      %p226 = por %p224, %p225
      %p227 = scmp.ne.s32.totalorder %s218, %s219
      %p228 = scmp.eq.s32.totalorder %s30, 0
      %p229 = por %p227, %p228
      %p230 = scmp.ne.s32.totalorder %s218, %s219
      %p231 = scmp.eq.s32.totalorder %s31, 1
      %p232 = por %p230, %p231
      %p234 = scmp.ne.s32.totalorder %s219, %s233
      %p235 = scmp.eq.s32.totalorder %s31, 0
      %p236 = por %p234, %p235
      %s238 = sadd.s32 %s237, 1
      %p241 = scmp.eq.s32.totalorder %s25, 1
      %p242 = scmp.ne.s32.totalorder %s237, %s239
      %p243 = scmp.eq.s32.totalorder %s25, 0
      %p244 = por %p242, %p243
      %p245 = scmp.ne.s32.totalorder %s237, %s239
      %p246 = scmp.eq.s32.totalorder %s30, 1
      %p247 = por %p245, %p246
      %p248 = scmp.ne.s32.totalorder %s239, %s240
      %p249 = scmp.eq.s32.totalorder %s30, 0
      %p250 = por %p248, %p249
      %p251 = scmp.ne.s32.totalorder %s239, %s240
      %p252 = scmp.eq.s32.totalorder %s31, 1
      %p253 = por %p251, %p252
      %p255 = scmp.ne.s32.totalorder %s240, %s254
      %p256 = scmp.eq.s32.totalorder %s31, 0
      %p257 = por %p255, %p256
      %s259 = sadd.s32 %s258, 1
      %p262 = scmp.eq.s32.totalorder %s25, 1
      %p263 = scmp.ne.s32.totalorder %s258, %s260
      %p264 = scmp.eq.s32.totalorder %s25, 0
      %p265 = por %p263, %p264
      %p266 = scmp.ne.s32.totalorder %s258, %s260
      %p267 = scmp.eq.s32.totalorder %s30, 1
      %p268 = por %p266, %p267
      %p269 = scmp.ne.s32.totalorder %s260, %s261
      %p270 = scmp.eq.s32.totalorder %s30, 0
      %p271 = por %p269, %p270
      %p272 = scmp.ne.s32.totalorder %s260, %s261
      %p273 = scmp.eq.s32.totalorder %s31, 1
      %p274 = por %p272, %p273
      %p276 = scmp.ne.s32.totalorder %s261, %s275
      %p277 = scmp.eq.s32.totalorder %s31, 0
      %p278 = por %p276, %p277
      %s280 = sadd.s32 %s279, 1
      %p283 = scmp.eq.s32.totalorder %s25, 1
      %p284 = scmp.ne.s32.totalorder %s279, %s281
      %p285 = scmp.eq.s32.totalorder %s25, 0
      %p286 = por %p284, %p285
      %p287 = scmp.ne.s32.totalorder %s279, %s281
      %p288 = scmp.eq.s32.totalorder %s30, 1
      %p289 = por %p287, %p288
      %p290 = scmp.ne.s32.totalorder %s281, %s282
      %p291 = scmp.eq.s32.totalorder %s30, 0
      %p292 = por %p290, %p291
      %p293 = scmp.ne.s32.totalorder %s281, %s282
      %p294 = scmp.eq.s32.totalorder %s31, 1
      %p295 = por %p293, %p294
      %p297 = scmp.ne.s32.totalorder %s282, %s296
      %p298 = scmp.eq.s32.totalorder %s31, 0
      %p299 = por %p297, %p298
      %s301 = sadd.s32 %s300, 1
      %p304 = scmp.eq.s32.totalorder %s25, 1
      %p305 = scmp.ne.s32.totalorder %s300, %s302
      %p306 = scmp.eq.s32.totalorder %s25, 0
      %p307 = por %p305, %p306
      %p308 = scmp.ne.s32.totalorder %s300, %s302
      %p309 = scmp.eq.s32.totalorder %s30, 1
      %p310 = por %p308, %p309
      %p311 = scmp.ne.s32.totalorder %s302, %s303
      %p312 = scmp.eq.s32.totalorder %s30, 0
      %p313 = por %p311, %p312
      %p314 = scmp.ne.s32.totalorder %s302, %s303
      %p315 = scmp.eq.s32.totalorder %s31, 1
      %p316 = por %p314, %p315
      %p318 = scmp.ne.s32.totalorder %s303, %s317
      %p319 = scmp.eq.s32.totalorder %s31, 0
      %p320 = por %p318, %p319
      %s321 = ssub.s32 %s25, %s32
      %p322 = scmp.eq.s32.totalorder %s321, 0
      %s324 = sadd.s32 %s323, 1
      %s325 = scalar_select %p322, %s323, %s324
      %p328 = pneg %p322
      %p329 = scmp.eq.s32.totalorder %s25, 1
      %p330 = por %p328, %p329
      %p331 = scmp.ne.s32.totalorder %s323, %s326
      %p332 = scmp.eq.s32.totalorder %s25, 0
      %p333 = por %p331, %p332
      %p334 = scmp.ne.s32.totalorder %s323, %s326
      %p335 = scmp.eq.s32.totalorder %s30, 1
      %p336 = por %p334, %p335
      %p337 = scmp.ne.s32.totalorder %s326, %s327
      %p338 = scmp.eq.s32.totalorder %s30, 0
      %p339 = por %p337, %p338
      %p340 = scmp.ne.s32.totalorder %s326, %s327
      %p341 = scmp.eq.s32.totalorder %s31, 1
      %p342 = por %p340, %p341
      %p344 = scmp.ne.s32.totalorder %s327, %s343
      %p345 = scmp.eq.s32.totalorder %s31, 0
      %p346 = por %p344, %p345
      %p347 = scmp.le.s32.totalorder 1, %s25
      %p348 = scmp.lt.s32.totalorder %s25, 3
      %p349 = pnand %p347, %p348
      %p350 = pneg %p349
      // Predicated region
      $region9: #{basic_attn_forward.1} parent=5 // pred_check
        _
      $region10: #{basic_attn_forward.1} parent=5 // pred_check_branch
        %352 = sbr.rel (%p349) target = $region12
      $region11: #{basic_attn_forward.1} parent=5 // pred_region
        %s353 = ssub.s32 %s25, 1
        // Predicated region
        $region13: #{basic_attn_forward.1} parent=11 // pred_check
          %p354 = pneg %p124
        $region14: #{basic_attn_forward.1} parent=11 // pred_check_branch
          %356 = sbr.rel (%p354) target = $region16
        $region15: #{basic_attn_forward.1} parent=11 // pred_region
          _
        $region16: #{basic_attn_forward.1} parent=11 // pred_fallthru
          _
        // Predicated region
        $region17: #{basic_attn_forward.1} parent=11 // pred_check
          %p357 = pneg %p145
        $region18: #{basic_attn_forward.1} parent=11 // pred_check_branch
          %359 = sbr.rel (%p357) target = $region20
        $region19: #{basic_attn_forward.1} parent=11 // pred_region
          %s361 = ssub.s32 16, 16
          %362 = vsyncadd [#allocation3], %s361
          %s364 = sshll.u32 [#allocation2], 4
          %s365 = int_to_ptr.vmem [resolvable:$true] %s364
          %367 = dma.hbm_to_vmem [thread:$0]  %s4, 16, %s365, [#allocation3]
        $region20: #{basic_attn_forward.1} parent=11 // pred_fallthru
          _
        // Predicated region
        $region21: #{basic_attn_forward.1} parent=11 // pred_check
          %p368 = pneg %p166
        $region22: #{basic_attn_forward.1} parent=11 // pred_check_branch
          %370 = sbr.rel (%p368) target = $region24
        $region23: #{basic_attn_forward.1} parent=11 // pred_region
          _
        $region24: #{basic_attn_forward.1} parent=11 // pred_fallthru
          _
        // Predicated region
        $region25: #{basic_attn_forward.1} parent=11 // pred_check
          %p371 = pneg %p187
        $region26: #{basic_attn_forward.1} parent=11 // pred_check_branch
          %373 = sbr.rel (%p371) target = $region28
        $region27: #{basic_attn_forward.1} parent=11 // pred_region
          %s375 = ssub.s32 16, 16
          %376 = vsyncadd [#allocation6], %s375
          %s378 = sshll.u32 [#allocation5], 4
          %s379 = int_to_ptr.vmem [resolvable:$true] %s378
          %381 = dma.hbm_to_vmem [thread:$0]  %s6, 16, %s379, [#allocation6]
        $region28: #{basic_attn_forward.1} parent=11 // pred_fallthru
          _
        // Predicated region
        $region29: #{basic_attn_forward.1} parent=11 // pred_check
          %p382 = pneg %p208
        $region30: #{basic_attn_forward.1} parent=11 // pred_check_branch
          %384 = sbr.rel (%p382) target = $region32
        $region31: #{basic_attn_forward.1} parent=11 // pred_region
          _
        $region32: #{basic_attn_forward.1} parent=11 // pred_fallthru
          _
        // Predicated region
        $region33: #{basic_attn_forward.1} parent=11 // pred_check
          %p385 = pneg %p229
        $region34: #{basic_attn_forward.1} parent=11 // pred_check_branch
          %387 = sbr.rel (%p385) target = $region36
        $region35: #{basic_attn_forward.1} parent=11 // pred_region
          %s389 = ssub.s32 16, 16
          %390 = vsyncadd [#allocation6], %s389
          %s392 = sshll.u32 [#allocation7], 4
          %s393 = int_to_ptr.vmem [resolvable:$true] %s392
          %395 = dma.hbm_to_vmem [thread:$0]  %s8, 16, %s393, [#allocation6]
        $region36: #{basic_attn_forward.1} parent=11 // pred_fallthru
          _
        // Predicated region
        $region37: #{basic_attn_forward.1} parent=11 // pred_check
          %p396 = pneg %p250
        $region38: #{basic_attn_forward.1} parent=11 // pred_check_branch
          %398 = sbr.rel (%p396) target = $region40
        $region39: #{basic_attn_forward.1} parent=11 // pred_region
          _
        $region40: #{basic_attn_forward.1} parent=11 // pred_fallthru
          _
        // Predicated region
        $region41: #{basic_attn_forward.1} parent=11 // pred_check
          %p399 = pneg %p271
        $region42: #{basic_attn_forward.1} parent=11 // pred_check_branch
          %401 = sbr.rel (%p399) target = $region44
        $region43: #{basic_attn_forward.1} parent=11 // pred_region
          %s403 = ssub.s32 16, 16
          %404 = vsyncadd [#allocation9], %s403
          %s406 = sshll.u32 [#allocation8], 4
          %s407 = int_to_ptr.vmem [resolvable:$true] %s406
          %409 = dma.hbm_to_vmem [thread:$0]  %s10, 16, %s407, [#allocation9]
        $region44: #{basic_attn_forward.1} parent=11 // pred_fallthru
          _
        // Predicated region
        $region45: #{basic_attn_forward.1} parent=11 // pred_check
          %p410 = pneg %p292
        $region46: #{basic_attn_forward.1} parent=11 // pred_check_branch
          %412 = sbr.rel (%p410) target = $region48
        $region47: #{basic_attn_forward.1} parent=11 // pred_region
          _
        $region48: #{basic_attn_forward.1} parent=11 // pred_fallthru
          _
        // Predicated region
        $region49: #{basic_attn_forward.1} parent=11 // pred_check
          %p413 = pneg %p313
        $region50: #{basic_attn_forward.1} parent=11 // pred_check_branch
          %415 = sbr.rel (%p413) target = $region52
        $region51: #{basic_attn_forward.1} parent=11 // pred_region
          %s417 = ssub.s32 16, 16
          %418 = vsyncadd [#allocation9], %s417
          %s420 = sshll.u32 [#allocation10], 4
          %s421 = int_to_ptr.vmem [resolvable:$true] %s420
          %423 = dma.hbm_to_vmem [thread:$0]  %s12, 16, %s421, [#allocation9]
        $region52: #{basic_attn_forward.1} parent=11 // pred_fallthru
          _
      $region12: #{basic_attn_forward.1} parent=5 // pred_fallthru
        _
      %p424 = scmp.lt.s32.totalorder %s25, 2
      // Predicated region
      $region53: #{basic_attn_forward.1} parent=5 // pred_check
        %p425 = pneg %p424
      $region54: #{basic_attn_forward.1} parent=5 // pred_check_branch
        %427 = sbr.rel (%p425) target = $region56
      $region55: #{basic_attn_forward.1} parent=5 // pred_region
        // Predicated region
        $region57: #{basic_attn_forward.1} parent=55 // pred_check
          %p428 = pneg %p45
        $region58: #{basic_attn_forward.1} parent=55 // pred_check_branch
          %430 = sbr.rel (%p428) target = $region60
        $region59: #{basic_attn_forward.1} parent=55 // pred_region
          %p431 = scmp.lt.s32.totalorder %s25, 1
          %s432 = scalar_select %p431, %s25, 1
          %s433 = scalar_lea.vmem %s0, %s432
        $region60: #{basic_attn_forward.1} parent=55 // pred_fallthru
          _
        // Predicated region
        $region61: #{basic_attn_forward.1} parent=55 // pred_check
          %p434 = pneg %p71
        $region62: #{basic_attn_forward.1} parent=55 // pred_check_branch
          %436 = sbr.rel (%p434) target = $region64
        $region63: #{basic_attn_forward.1} parent=55 // pred_region
          %p437 = scmp.lt.s32.totalorder %s25, 1
          %s438 = scalar_select %p437, %s25, 1
          %s439 = smul.addr %s438, 8
          %s440 = scalar_lea.vmem %s1, %s439
        $region64: #{basic_attn_forward.1} parent=55 // pred_fallthru
          _
        // Predicated region
        $region65: #{basic_attn_forward.1} parent=55 // pred_check
          %p441 = pneg %p97
        $region66: #{basic_attn_forward.1} parent=55 // pred_check_branch
          %443 = sbr.rel (%p441) target = $region68
        $region67: #{basic_attn_forward.1} parent=55 // pred_region
          %p444 = scmp.lt.s32.totalorder %s25, 1
          %s445 = scalar_select %p444, %s25, 1
          %s446 = smul.addr %s445, 8
          %s447 = scalar_lea.vmem %s2, %s446
        $region68: #{basic_attn_forward.1} parent=55 // pred_fallthru
          _
      $region56: #{basic_attn_forward.1} parent=5 // pred_fallthru
        _
      %p448 = scmp.le.s32.totalorder 1, %s25
      %p449 = scmp.lt.s32.totalorder %s25, 3
      %p450 = pnand %p448, %p449
      %p451 = pneg %p450
      // Predicated region
      $region69: #{basic_attn_forward.1} parent=5 // pred_check
        _
      $region70: #{basic_attn_forward.1} parent=5 // pred_check_branch
        %453 = sbr.rel (%p450) target = $region72
      $region71: #{basic_attn_forward.1} parent=5 // pred_region
        %s454 = ssub.s32 %s25, 1
        // Predicated region
        $region73: #{basic_attn_forward.1} parent=71 // pred_check
          %p455 = pneg %p145
        $region74: #{basic_attn_forward.1} parent=71 // pred_check_branch
          %457 = sbr.rel (%p455) target = $region76
        $region75: #{basic_attn_forward.1} parent=71 // pred_region
          %458 = dma.done [#allocation3], 16
        $region76: #{basic_attn_forward.1} parent=71 // pred_fallthru
          _
        // Predicated region
        $region77: #{basic_attn_forward.1} parent=71 // pred_check
          %p459 = pneg %p187
        $region78: #{basic_attn_forward.1} parent=71 // pred_check_branch
          %461 = sbr.rel (%p459) target = $region80
        $region79: #{basic_attn_forward.1} parent=71 // pred_region
          %462 = dma.done [#allocation6], 16
        $region80: #{basic_attn_forward.1} parent=71 // pred_fallthru
          _
        // Predicated region
        $region81: #{basic_attn_forward.1} parent=71 // pred_check
          %p463 = pneg %p229
        $region82: #{basic_attn_forward.1} parent=71 // pred_check_branch
          %465 = sbr.rel (%p463) target = $region84
        $region83: #{basic_attn_forward.1} parent=71 // pred_region
          %466 = dma.done [#allocation6], 16
        $region84: #{basic_attn_forward.1} parent=71 // pred_fallthru
          _
        // Predicated region
        $region85: #{basic_attn_forward.1} parent=71 // pred_check
          %p467 = pneg %p271
        $region86: #{basic_attn_forward.1} parent=71 // pred_check_branch
          %469 = sbr.rel (%p467) target = $region88
        $region87: #{basic_attn_forward.1} parent=71 // pred_region
          %470 = dma.done [#allocation9], 16
        $region88: #{basic_attn_forward.1} parent=71 // pred_fallthru
          _
        // Predicated region
        $region89: #{basic_attn_forward.1} parent=71 // pred_check
          %p471 = pneg %p313
        $region90: #{basic_attn_forward.1} parent=71 // pred_check_branch
          %473 = sbr.rel (%p471) target = $region92
        $region91: #{basic_attn_forward.1} parent=71 // pred_region
          %474 = dma.done [#allocation9], 16
        $region92: #{basic_attn_forward.1} parent=71 // pred_fallthru
          _
        %p475 = scmp.lt.s32.totalorder %s30, 1
        %s476 = scalar_select %p475, %s30, 1
        %s477 = scalar_lea.vmem %s0, %s476
        %p478 = pneg %p51
        %p479 = pneg %p48
        %p480 = scmp.lt.s32.totalorder %s30, 1
        %s481 = scalar_select %p480, %s30, 1
        %s482 = smul.addr %s481, 8
        %s483 = scalar_lea.vmem %s1, %s482
        %p484 = pneg %p77
        %p485 = pneg %p74
        %p486 = scmp.lt.s32.totalorder %s30, 1
        %s487 = scalar_select %p486, %s30, 1
        %s488 = smul.addr %s487, 8
        %s489 = scalar_lea.vmem %s2, %s488
        %p490 = pneg %p103
        %p491 = pneg %p100
        %p492 = pneg %p124
        %p493 = pneg %p121
        %p494 = pneg %p145
        %p495 = pneg %p142
        %p496 = pneg %p166
        %p497 = pneg %p163
        %p498 = pneg %p187
        %p499 = pneg %p184
        %p500 = pneg %p208
        %p501 = pneg %p205
        %p502 = pneg %p229
        %p503 = pneg %p226
        %p504 = pneg %p250
        %p505 = pneg %p247
        %p506 = pneg %p271
        %p507 = pneg %p268
        %p508 = pneg %p292
        %p509 = pneg %p289
        %p510 = pneg %p313
        %p511 = pneg %p310
        %p512 = pneg %p339
        %p513 = pneg %p336
        %s514 = sand.u32 %s326, 1
        %s515 = scalar_lea.sflag [#allocation4], %s514
        %s516 = sand.u32 %s326, 1
        %s517 = scalar_lea.vmem [#allocation11], %s516
        %p518 = scmp.lt.s32.totalorder %s30, 1
        %s519 = scalar_select %p518, %s30, 1
        %s520 = scalar_lea.vmem %s0, %s519
        %p521 = scmp.lt.s32.totalorder %s30, 1
        %s522 = scalar_select %p521, %s30, 1
        %s523 = smul.addr %s522, 8
        %s524 = scalar_lea.vmem %s1, %s523
        %p525 = scmp.lt.s32.totalorder %s30, 1
        %s526 = scalar_select %p525, %s30, 1
        %s527 = smul.addr %s526, 8
        %s528 = scalar_lea.vmem %s2, %s527
        %v529 = vld [vmem:[%s520] sm:$0x1]
        %v530 = vld [vmem:[%s3] sm:$0xff]
        %v531 = vld [vmem:[%s3 + $0x8] sm:$0xff]
        %v532 = vld [vmem:[#allocation2] sm:$0x1]
        %vm533 = vcmask 130048
        %v535 = vsel %vm533, %v529, 0
        %537 = vmatprep.subr.mxu0 0.0
        %538 = vmatpush1.msra.mxu0 %v530
        %539 = vmatprep.subr.mxu0 0.0
        %540 = vmatpush1.msra.mxu0 %v531
        %541 = vmatprep.subr.mxu0 0.0
        %542 = vmatpush1.msra.mxu0 0.0
        %543 = vmatprep.subr.mxu0 0.0
        %544 = vmatpush1.msra.mxu0 0.0
        %545 = vmatprep.subr.mxu0 0.0
        %546 = vmatpush1.msra.mxu0 0.0
        %547 = vmatprep.subr.mxu0 0.0
        %548 = vmatpush1.msra.mxu0 0.0
        %549 = vmatprep.subr.mxu0 0.0
        %550 = vmatpush1.msra.mxu0 0.0
        %551 = vmatprep.subr.mxu0 0.0
        %552 = vmatpush1.msra.mxu0 0.0
        %553 = vmatprep.subr.mxu0 0.0
        %554 = vmatpush1.msra.mxu0 0.0
        %555 = vmatprep.subr.mxu0 0.0
        %556 = vmatpush1.msra.mxu0 0.0
        %557 = vmatprep.subr.mxu0 0.0
        %558 = vmatpush1.msra.mxu0 0.0
        %559 = vmatprep.subr.mxu0 0.0
        %560 = vmatpush1.msra.mxu0 0.0
        %561 = vmatprep.subr.mxu0 0.0
        %562 = vmatpush1.msra.mxu0 0.0
        %563 = vmatprep.subr.mxu0 0.0
        %564 = vmatpush1.msra.mxu0 0.0
        %565 = vmatprep.subr.mxu0 0.0
        %566 = vmatpush1.msra.mxu0 0.0
        %567 = vmatprep.subr.mxu0 0.0
        %568 = vmatpush1.msra.mxu0 0.0
        %569 = vmatprep.subr.mxu0 0.0
        %570 = vmatpush1.msra.mxu0 0.0
        %571 = vmatprep.subr.mxu0 0.0
        %572 = vmatpush1.msra.mxu0 0.0
        %573 = vmatprep.subr.mxu0 0.0
        %574 = vmatpush1.msra.mxu0 0.0
        %575 = vmatprep.subr.mxu0 0.0
        %576 = vmatpush1.msra.mxu0 0.0
        %577 = vmatprep.subr.mxu0 0.0
        %578 = vmatpush1.msra.mxu0 0.0
        %579 = vmatprep.subr.mxu0 0.0
        %580 = vmatpush1.msra.mxu0 0.0
        %581 = vmatprep.subr.mxu0 0.0
        %582 = vmatpush1.msra.mxu0 0.0
        %583 = vmatprep.subr.mxu0 0.0
        %584 = vmatpush1.msra.mxu0 0.0
        %585 = vmatprep.subr.mxu0 0.0
        %586 = vmatpush1.msra.mxu0 0.0
        %587 = vmatprep.subr.mxu0 0.0
        %588 = vmatpush1.msra.mxu0 0.0
        %589 = vmatprep.subr.mxu0 0.0
        %590 = vmatpush1.msra.mxu0 0.0
        %591 = vmatprep.subr.mxu0 0.0
        %592 = vmatpush1.msra.mxu0 0.0
        %593 = vmatprep.subr.mxu0 0.0
        %594 = vmatpush1.msra.mxu0 0.0
        %595 = vmatprep.subr.mxu0 0.0
        %596 = vmatpush1.msra.mxu0 0.0
        %597 = vmatprep.subr.mxu0 0.0
        %598 = vmatpush1.msra.mxu0 0.0
        %599 = vmatprep.subr.mxu0 0.0
        %600 = vmatpush1.msra.mxu0 0.0
        %601 = vmatprep.mubr.f32.mxu0 0.0
        %602 = vmatmul.mubr.f32.gmra.mrb[0].mxu0 %v535
        %v603 = vpop.f32.mrb[0].mxu0
        %v604 = vadd.f32 %v532, %v603
        %v605 = vpop.f32.mrb[0].mxu0
        %606 = vdwg.mxu0
        %v607 = vld [vmem:[%s524] sm:$0xff]
        %v608 = vld [vmem:[%s5] sm:$0xff]
        %v609 = vld [vmem:[%s5 + $0x8] sm:$0xff]
        %v610 = vld [vmem:[#allocation5] sm:$0x1]
        %v612 = vlaneseq
        %v613 = vshrl.u32 %v612, 7
        %v614 = vsub.s32 0, %v613
        %v615 = vrot.slane %v610, %v614
        %v618 = vsel %vm533, %v607, 0
        %620 = vmatprep.subr.mxu0 0.0
        %621 = vmatpush1.msra.mxu0 %v608
        %622 = vmatprep.subr.mxu0 0.0
        %623 = vmatpush1.msra.mxu0 %v609
        %624 = vmatprep.subr.mxu0 0.0
        %625 = vmatpush1.msra.mxu0 0.0
        %626 = vmatprep.subr.mxu0 0.0
        %627 = vmatpush1.msra.mxu0 0.0
        %628 = vmatprep.subr.mxu0 0.0
        %629 = vmatpush1.msra.mxu0 0.0
        %630 = vmatprep.subr.mxu0 0.0
        %631 = vmatpush1.msra.mxu0 0.0
        %632 = vmatprep.subr.mxu0 0.0
        %633 = vmatpush1.msra.mxu0 0.0
        %634 = vmatprep.subr.mxu0 0.0
        %635 = vmatpush1.msra.mxu0 0.0
        %636 = vmatprep.subr.mxu0 0.0
        %637 = vmatpush1.msra.mxu0 0.0
        %638 = vmatprep.subr.mxu0 0.0
        %639 = vmatpush1.msra.mxu0 0.0
        %640 = vmatprep.subr.mxu0 0.0
        %641 = vmatpush1.msra.mxu0 0.0
        %642 = vmatprep.subr.mxu0 0.0
        %643 = vmatpush1.msra.mxu0 0.0
        %644 = vmatprep.subr.mxu0 0.0
        %645 = vmatpush1.msra.mxu0 0.0
        %646 = vmatprep.subr.mxu0 0.0
        %647 = vmatpush1.msra.mxu0 0.0
        %648 = vmatprep.subr.mxu0 0.0
        %649 = vmatpush1.msra.mxu0 0.0
        %650 = vmatprep.subr.mxu0 0.0
        %651 = vmatpush1.msra.mxu0 0.0
        %652 = vmatprep.subr.mxu0 0.0
        %653 = vmatpush1.msra.mxu0 0.0
        %654 = vmatprep.subr.mxu0 0.0
        %655 = vmatpush1.msra.mxu0 0.0
        %656 = vmatprep.subr.mxu0 0.0
        %657 = vmatpush1.msra.mxu0 0.0
        %658 = vmatprep.subr.mxu0 0.0
        %659 = vmatpush1.msra.mxu0 0.0
        %660 = vmatprep.subr.mxu0 0.0
        %661 = vmatpush1.msra.mxu0 0.0
        %662 = vmatprep.subr.mxu0 0.0
        %663 = vmatpush1.msra.mxu0 0.0
        %664 = vmatprep.subr.mxu0 0.0
        %665 = vmatpush1.msra.mxu0 0.0
        %666 = vmatprep.subr.mxu0 0.0
        %667 = vmatpush1.msra.mxu0 0.0
        %668 = vmatprep.subr.mxu0 0.0
        %669 = vmatpush1.msra.mxu0 0.0
        %670 = vmatprep.subr.mxu0 0.0
        %671 = vmatpush1.msra.mxu0 0.0
        %672 = vmatprep.subr.mxu0 0.0
        %673 = vmatpush1.msra.mxu0 0.0
        %674 = vmatprep.subr.mxu0 0.0
        %675 = vmatpush1.msra.mxu0 0.0
        %676 = vmatprep.subr.mxu0 0.0
        %677 = vmatpush1.msra.mxu0 0.0
        %678 = vmatprep.subr.mxu0 0.0
        %679 = vmatpush1.msra.mxu0 0.0
        %680 = vmatprep.subr.mxu0 0.0
        %681 = vmatpush1.msra.mxu0 0.0
        %682 = vmatprep.subr.mxu0 0.0
        %683 = vmatpush1.msra.mxu0 0.0
        %684 = vmatprep.mubr.f32.mxu0 0.0
        %685 = vmatmul.mubr.f32.gmra.mrb[0].mxu0 %v618
        %v686 = vpop.f32.mrb[0].mxu0
        %v687 = vadd.f32 %v615, %v686
        %v688 = vpop.f32.mrb[0].mxu0
        %689 = vdwg.mxu0
        %v690 = vld [vmem:[%s528] sm:$0xff]
        %v691 = vld [vmem:[%s7] sm:$0xf]
        %v692 = vld [vmem:[#allocation7] sm:$0x1]
        %v694 = vlaneseq
        %v695 = vshrl.u32 %v694, 7
        %v696 = vsub.s32 0, %v695
        %v697 = vrot.slane %v692, %v696
        %vm699 = vcmask 31744
        %v701 = vsel %vm699, %v690, 0
        %vm703 = vcmask 1043456
        %v705 = vsel %vm703, %v691, 0
        %707 = vmatprep.subr.mxu0 0.0
        %708 = vmatpush1.msra.mxu0 %v705
        %709 = vmatprep.subr.mxu0 0.0
        %710 = vmatpush1.msra.mxu0 0.0
        %711 = vmatprep.subr.mxu0 0.0
        %712 = vmatpush1.msra.mxu0 0.0
        %713 = vmatprep.subr.mxu0 0.0
        %714 = vmatpush1.msra.mxu0 0.0
        %715 = vmatprep.subr.mxu0 0.0
        %716 = vmatpush1.msra.mxu0 0.0
        %717 = vmatprep.subr.mxu0 0.0
        %718 = vmatpush1.msra.mxu0 0.0
        %719 = vmatprep.subr.mxu0 0.0
        %720 = vmatpush1.msra.mxu0 0.0
        %721 = vmatprep.subr.mxu0 0.0
        %722 = vmatpush1.msra.mxu0 0.0
        %723 = vmatprep.subr.mxu0 0.0
        %724 = vmatpush1.msra.mxu0 0.0
        %725 = vmatprep.subr.mxu0 0.0
        %726 = vmatpush1.msra.mxu0 0.0
        %727 = vmatprep.subr.mxu0 0.0
        %728 = vmatpush1.msra.mxu0 0.0
        %729 = vmatprep.subr.mxu0 0.0
        %730 = vmatpush1.msra.mxu0 0.0
        %731 = vmatprep.subr.mxu0 0.0
        %732 = vmatpush1.msra.mxu0 0.0
        %733 = vmatprep.subr.mxu0 0.0
        %734 = vmatpush1.msra.mxu0 0.0
        %735 = vmatprep.subr.mxu0 0.0
        %736 = vmatpush1.msra.mxu0 0.0
        %737 = vmatprep.subr.mxu0 0.0
        %738 = vmatpush1.msra.mxu0 0.0
        %739 = vmatprep.subr.mxu0 0.0
        %740 = vmatpush1.msra.mxu0 0.0
        %741 = vmatprep.subr.mxu0 0.0
        %742 = vmatpush1.msra.mxu0 0.0
        %743 = vmatprep.subr.mxu0 0.0
        %744 = vmatpush1.msra.mxu0 0.0
        %745 = vmatprep.subr.mxu0 0.0
        %746 = vmatpush1.msra.mxu0 0.0
        %747 = vmatprep.subr.mxu0 0.0
        %748 = vmatpush1.msra.mxu0 0.0
        %749 = vmatprep.subr.mxu0 0.0
        %750 = vmatpush1.msra.mxu0 0.0
        %751 = vmatprep.subr.mxu0 0.0
        %752 = vmatpush1.msra.mxu0 0.0
        %753 = vmatprep.subr.mxu0 0.0
        %754 = vmatpush1.msra.mxu0 0.0
        %755 = vmatprep.subr.mxu0 0.0
        %756 = vmatpush1.msra.mxu0 0.0
        %757 = vmatprep.subr.mxu0 0.0
        %758 = vmatpush1.msra.mxu0 0.0
        %759 = vmatprep.subr.mxu0 0.0
        %760 = vmatpush1.msra.mxu0 0.0
        %761 = vmatprep.subr.mxu0 0.0
        %762 = vmatpush1.msra.mxu0 0.0
        %763 = vmatprep.subr.mxu0 0.0
        %764 = vmatpush1.msra.mxu0 0.0
        %765 = vmatprep.subr.mxu0 0.0
        %766 = vmatpush1.msra.mxu0 0.0
        %767 = vmatprep.subr.mxu0 0.0
        %768 = vmatpush1.msra.mxu0 0.0
        %769 = vmatprep.subr.mxu0 0.0
        %770 = vmatpush1.msra.mxu0 0.0
        %771 = vmatprep.mubr.f32.mxu0 0.0
        %772 = vmatmul.mubr.f32.gmra.mrb[0].mxu0 %v701
        %v773 = vpop.f32.mrb[0].mxu0
        %v774 = vadd.f32 %v697, %v773
        %v775 = vpop.f32.mrb[0].mxu0
        %776 = vdwg.mxu0
        %v777 = vmul.f32 %v604, 0.25
        %v779 = vsel %vm533, %v777, 0
        %v782 = vsel %vm533, %v687, 0
        %784 = vmatprep.subr.mxu0 0.0
        %785 = vmatpush1.xpose.msra.mxu0 %v782
        %786 = vmatprep.subr.mxu0 0.0
        %787 = vmatpush1.xpose.msra.mxu0 0.0
        %788 = vmatprep.subr.mxu0 0.0
        %789 = vmatpush1.xpose.msra.mxu0 0.0
        %790 = vmatprep.subr.mxu0 0.0
        %791 = vmatpush1.xpose.msra.mxu0 0.0
        %792 = vmatprep.subr.mxu0 0.0
        %793 = vmatpush1.xpose.msra.mxu0 0.0
        %794 = vmatprep.subr.mxu0 0.0
        %795 = vmatpush1.xpose.msra.mxu0 0.0
        %796 = vmatprep.subr.mxu0 0.0
        %797 = vmatpush1.xpose.msra.mxu0 0.0
        %798 = vmatprep.subr.mxu0 0.0
        %799 = vmatpush1.xpose.msra.mxu0 0.0
        %800 = vmatprep.subr.mxu0 0.0
        %801 = vmatpush1.xpose.msra.mxu0 0.0
        %802 = vmatprep.subr.mxu0 0.0
        %803 = vmatpush1.xpose.msra.mxu0 0.0
        %804 = vmatprep.subr.mxu0 0.0
        %805 = vmatpush1.xpose.msra.mxu0 0.0
        %806 = vmatprep.subr.mxu0 0.0
        %807 = vmatpush1.xpose.msra.mxu0 0.0
        %808 = vmatprep.subr.mxu0 0.0
        %809 = vmatpush1.xpose.msra.mxu0 0.0
        %810 = vmatprep.subr.mxu0 0.0
        %811 = vmatpush1.xpose.msra.mxu0 0.0
        %812 = vmatprep.subr.mxu0 0.0
        %813 = vmatpush1.xpose.msra.mxu0 0.0
        %814 = vmatprep.subr.mxu0 0.0
        %815 = vmatpush1.xpose.msra.mxu0 0.0
        %816 = vmatprep.subr.mxu0 0.0
        %817 = vmatpush1.xpose.msra.mxu0 0.0
        %818 = vmatprep.subr.mxu0 0.0
        %819 = vmatpush1.xpose.msra.mxu0 0.0
        %820 = vmatprep.subr.mxu0 0.0
        %821 = vmatpush1.xpose.msra.mxu0 0.0
        %822 = vmatprep.subr.mxu0 0.0
        %823 = vmatpush1.xpose.msra.mxu0 0.0
        %824 = vmatprep.subr.mxu0 0.0
        %825 = vmatpush1.xpose.msra.mxu0 0.0
        %826 = vmatprep.subr.mxu0 0.0
        %827 = vmatpush1.xpose.msra.mxu0 0.0
        %828 = vmatprep.subr.mxu0 0.0
        %829 = vmatpush1.xpose.msra.mxu0 0.0
        %830 = vmatprep.subr.mxu0 0.0
        %831 = vmatpush1.xpose.msra.mxu0 0.0
        %832 = vmatprep.subr.mxu0 0.0
        %833 = vmatpush1.xpose.msra.mxu0 0.0
        %834 = vmatprep.subr.mxu0 0.0
        %835 = vmatpush1.xpose.msra.mxu0 0.0
        %836 = vmatprep.subr.mxu0 0.0
        %837 = vmatpush1.xpose.msra.mxu0 0.0
        %838 = vmatprep.subr.mxu0 0.0
        %839 = vmatpush1.xpose.msra.mxu0 0.0
        %840 = vmatprep.subr.mxu0 0.0
        %841 = vmatpush1.xpose.msra.mxu0 0.0
        %842 = vmatprep.subr.mxu0 0.0
        %843 = vmatpush1.xpose.msra.mxu0 0.0
        %844 = vmatprep.subr.mxu0 0.0
        %845 = vmatpush1.xpose.msra.mxu0 0.0
        %846 = vmatprep.subr.mxu0 0.0
        %847 = vmatpush1.xpose.msra.mxu0 0.0
        %848 = vmatprep.mubr.f32.mxu0 0.0
        %849 = vmatmul.mubr.f32.gmra.mrb[0].mxu0 %v779
        %v850 = vpop.f32.mrb[0].mxu0
        %v851 = vadd.f32 0.0, %v850
        %v852 = vpop.f32.mrb[0].mxu0
        %853 = vdwg.mxu0
        %vm854 = vcmask 57344
        %v855 = vsel %vm854, %v851, -inf
        %856 = vmax.xlane.f32.xlu0 %v855
        %v857 = vpop.xlane.xlu0 %856
        %v858 = vsub.f32 %v851, %v857
        %v859 = vmul.f32 %v858, 1.442695
        %v860 = vpow.pop %v859
        %v861 = vsel %vm854, %v860, 0.0
        %862 = vadd.xlane.f32.xlu0 %v861
        %v863 = vpop.xlane.xlu0 %862
        %v864 = vrcp.pop %v863
        %v865 = vmul.f32 %v860, %v864
        %vm866 = vcmask 64512
        %v868 = vsel %vm866, %v865, 0
        %870 = vmatprep.subr.mxu0 0.0
        %871 = vmatpush1.msra.mxu0 %v774
        %872 = vmatprep.subr.mxu0 0.0
        %873 = vmatpush1.msra.mxu0 0.0
        %874 = vmatprep.subr.mxu0 0.0
        %875 = vmatpush1.msra.mxu0 0.0
        %876 = vmatprep.subr.mxu0 0.0
        %877 = vmatpush1.msra.mxu0 0.0
        %878 = vmatprep.subr.mxu0 0.0
        %879 = vmatpush1.msra.mxu0 0.0
        %880 = vmatprep.subr.mxu0 0.0
        %881 = vmatpush1.msra.mxu0 0.0
        %882 = vmatprep.subr.mxu0 0.0
        %883 = vmatpush1.msra.mxu0 0.0
        %884 = vmatprep.subr.mxu0 0.0
        %885 = vmatpush1.msra.mxu0 0.0
        %886 = vmatprep.subr.mxu0 0.0
        %887 = vmatpush1.msra.mxu0 0.0
        %888 = vmatprep.subr.mxu0 0.0
        %889 = vmatpush1.msra.mxu0 0.0
        %890 = vmatprep.subr.mxu0 0.0
        %891 = vmatpush1.msra.mxu0 0.0
        %892 = vmatprep.subr.mxu0 0.0
        %893 = vmatpush1.msra.mxu0 0.0
        %894 = vmatprep.subr.mxu0 0.0
        %895 = vmatpush1.msra.mxu0 0.0
        %896 = vmatprep.subr.mxu0 0.0
        %897 = vmatpush1.msra.mxu0 0.0
        %898 = vmatprep.subr.mxu0 0.0
        %899 = vmatpush1.msra.mxu0 0.0
        %900 = vmatprep.subr.mxu0 0.0
        %901 = vmatpush1.msra.mxu0 0.0
        %902 = vmatprep.subr.mxu0 0.0
        %903 = vmatpush1.msra.mxu0 0.0
        %904 = vmatprep.subr.mxu0 0.0
        %905 = vmatpush1.msra.mxu0 0.0
        %906 = vmatprep.subr.mxu0 0.0
        %907 = vmatpush1.msra.mxu0 0.0
        %908 = vmatprep.subr.mxu0 0.0
        %909 = vmatpush1.msra.mxu0 0.0
        %910 = vmatprep.subr.mxu0 0.0
        %911 = vmatpush1.msra.mxu0 0.0
        %912 = vmatprep.subr.mxu0 0.0
        %913 = vmatpush1.msra.mxu0 0.0
        %914 = vmatprep.subr.mxu0 0.0
        %915 = vmatpush1.msra.mxu0 0.0
        %916 = vmatprep.subr.mxu0 0.0
        %917 = vmatpush1.msra.mxu0 0.0
        %918 = vmatprep.subr.mxu0 0.0
        %919 = vmatpush1.msra.mxu0 0.0
        %920 = vmatprep.subr.mxu0 0.0
        %921 = vmatpush1.msra.mxu0 0.0
        %922 = vmatprep.subr.mxu0 0.0
        %923 = vmatpush1.msra.mxu0 0.0
        %924 = vmatprep.subr.mxu0 0.0
        %925 = vmatpush1.msra.mxu0 0.0
        %926 = vmatprep.subr.mxu0 0.0
        %927 = vmatpush1.msra.mxu0 0.0
        %928 = vmatprep.subr.mxu0 0.0
        %929 = vmatpush1.msra.mxu0 0.0
        %930 = vmatprep.subr.mxu0 0.0
        %931 = vmatpush1.msra.mxu0 0.0
        %932 = vmatprep.subr.mxu0 0.0
        %933 = vmatpush1.msra.mxu0 0.0
        %934 = vmatprep.mubr.f32.mxu0 0.0
        %935 = vmatmul.mubr.f32.gmra.mrb[0].mxu0 %v868
        %v936 = vpop.f32.mrb[0].mxu0
        %v937 = vadd.f32 0.0, %v936
        %v938 = vpop.f32.mrb[0].mxu0
        %939 = vdwg.mxu0
        %v940 = vld [vmem:[%s9] sm:$0xff]
        %v941 = vld [vmem:[%s9 + $0x8] sm:$0xff]
        %v942 = vld [vmem:[#allocation8] sm:$0x1]
        %v944 = vsel %vm533, %v937, 0
        %946 = vmatprep.subr.mxu0 0.0
        %947 = vmatpush1.msra.mxu0 %v940
        %948 = vmatprep.subr.mxu0 0.0
        %949 = vmatpush1.msra.mxu0 %v941
        %950 = vmatprep.subr.mxu0 0.0
        %951 = vmatpush1.msra.mxu0 0.0
        %952 = vmatprep.subr.mxu0 0.0
        %953 = vmatpush1.msra.mxu0 0.0
        %954 = vmatprep.subr.mxu0 0.0
        %955 = vmatpush1.msra.mxu0 0.0
        %956 = vmatprep.subr.mxu0 0.0
        %957 = vmatpush1.msra.mxu0 0.0
        %958 = vmatprep.subr.mxu0 0.0
        %959 = vmatpush1.msra.mxu0 0.0
        %960 = vmatprep.subr.mxu0 0.0
        %961 = vmatpush1.msra.mxu0 0.0
        %962 = vmatprep.subr.mxu0 0.0
        %963 = vmatpush1.msra.mxu0 0.0
        %964 = vmatprep.subr.mxu0 0.0
        %965 = vmatpush1.msra.mxu0 0.0
        %966 = vmatprep.subr.mxu0 0.0
        %967 = vmatpush1.msra.mxu0 0.0
        %968 = vmatprep.subr.mxu0 0.0
        %969 = vmatpush1.msra.mxu0 0.0
        %970 = vmatprep.subr.mxu0 0.0
        %971 = vmatpush1.msra.mxu0 0.0
        %972 = vmatprep.subr.mxu0 0.0
        %973 = vmatpush1.msra.mxu0 0.0
        %974 = vmatprep.subr.mxu0 0.0
        %975 = vmatpush1.msra.mxu0 0.0
        %976 = vmatprep.subr.mxu0 0.0
        %977 = vmatpush1.msra.mxu0 0.0
        %978 = vmatprep.subr.mxu0 0.0
        %979 = vmatpush1.msra.mxu0 0.0
        %980 = vmatprep.subr.mxu0 0.0
        %981 = vmatpush1.msra.mxu0 0.0
        %982 = vmatprep.subr.mxu0 0.0
        %983 = vmatpush1.msra.mxu0 0.0
        %984 = vmatprep.subr.mxu0 0.0
        %985 = vmatpush1.msra.mxu0 0.0
        %986 = vmatprep.subr.mxu0 0.0
        %987 = vmatpush1.msra.mxu0 0.0
        %988 = vmatprep.subr.mxu0 0.0
        %989 = vmatpush1.msra.mxu0 0.0
        %990 = vmatprep.subr.mxu0 0.0
        %991 = vmatpush1.msra.mxu0 0.0
        %992 = vmatprep.subr.mxu0 0.0
        %993 = vmatpush1.msra.mxu0 0.0
        %994 = vmatprep.subr.mxu0 0.0
        %995 = vmatpush1.msra.mxu0 0.0
        %996 = vmatprep.subr.mxu0 0.0
        %997 = vmatpush1.msra.mxu0 0.0
        %998 = vmatprep.subr.mxu0 0.0
        %999 = vmatpush1.msra.mxu0 0.0
        %1000 = vmatprep.subr.mxu0 0.0
        %1001 = vmatpush1.msra.mxu0 0.0
        %1002 = vmatprep.subr.mxu0 0.0
        %1003 = vmatpush1.msra.mxu0 0.0
        %1004 = vmatprep.subr.mxu0 0.0
        %1005 = vmatpush1.msra.mxu0 0.0
        %1006 = vmatprep.subr.mxu0 0.0
        %1007 = vmatpush1.msra.mxu0 0.0
        %1008 = vmatprep.subr.mxu0 0.0
        %1009 = vmatpush1.msra.mxu0 0.0
        %1010 = vmatprep.mubr.f32.mxu0 0.0
        %1011 = vmatmul.mubr.f32.gmra.mrb[0].mxu0 %v944
        %v1012 = vpop.f32.mrb[0].mxu0
        %v1013 = vadd.f32 %v942, %v1012
        %v1014 = vpop.f32.mrb[0].mxu0
        %1015 = vdwg.mxu0
        %v1016 = vld [vmem:[%s11] sm:$0xff]
        %v1017 = vld [vmem:[%s11 + $0x8] sm:$0xff]
        %v1018 = vld [vmem:[#allocation10] sm:$0x1]
        %v1020 = vsel %vm533, %v1013, 0
        %1022 = vmatprep.subr.mxu0 0.0
        %1023 = vmatpush1.msra.mxu0 %v1016
        %1024 = vmatprep.subr.mxu0 0.0
        %1025 = vmatpush1.msra.mxu0 %v1017
        %1026 = vmatprep.subr.mxu0 0.0
        %1027 = vmatpush1.msra.mxu0 0.0
        %1028 = vmatprep.subr.mxu0 0.0
        %1029 = vmatpush1.msra.mxu0 0.0
        %1030 = vmatprep.subr.mxu0 0.0
        %1031 = vmatpush1.msra.mxu0 0.0
        %1032 = vmatprep.subr.mxu0 0.0
        %1033 = vmatpush1.msra.mxu0 0.0
        %1034 = vmatprep.subr.mxu0 0.0
        %1035 = vmatpush1.msra.mxu0 0.0
        %1036 = vmatprep.subr.mxu0 0.0
        %1037 = vmatpush1.msra.mxu0 0.0
        %1038 = vmatprep.subr.mxu0 0.0
        %1039 = vmatpush1.msra.mxu0 0.0
        %1040 = vmatprep.subr.mxu0 0.0
        %1041 = vmatpush1.msra.mxu0 0.0
        %1042 = vmatprep.subr.mxu0 0.0
        %1043 = vmatpush1.msra.mxu0 0.0
        %1044 = vmatprep.subr.mxu0 0.0
        %1045 = vmatpush1.msra.mxu0 0.0
        %1046 = vmatprep.subr.mxu0 0.0
        %1047 = vmatpush1.msra.mxu0 0.0
        %1048 = vmatprep.subr.mxu0 0.0
        %1049 = vmatpush1.msra.mxu0 0.0
        %1050 = vmatprep.subr.mxu0 0.0
        %1051 = vmatpush1.msra.mxu0 0.0
        %1052 = vmatprep.subr.mxu0 0.0
        %1053 = vmatpush1.msra.mxu0 0.0
        %1054 = vmatprep.subr.mxu0 0.0
        %1055 = vmatpush1.msra.mxu0 0.0
        %1056 = vmatprep.subr.mxu0 0.0
        %1057 = vmatpush1.msra.mxu0 0.0
        %1058 = vmatprep.subr.mxu0 0.0
        %1059 = vmatpush1.msra.mxu0 0.0
        %1060 = vmatprep.subr.mxu0 0.0
        %1061 = vmatpush1.msra.mxu0 0.0
        %1062 = vmatprep.subr.mxu0 0.0
        %1063 = vmatpush1.msra.mxu0 0.0
        %1064 = vmatprep.subr.mxu0 0.0
        %1065 = vmatpush1.msra.mxu0 0.0
        %1066 = vmatprep.subr.mxu0 0.0
        %1067 = vmatpush1.msra.mxu0 0.0
        %1068 = vmatprep.subr.mxu0 0.0
        %1069 = vmatpush1.msra.mxu0 0.0
        %1070 = vmatprep.subr.mxu0 0.0
        %1071 = vmatpush1.msra.mxu0 0.0
        %1072 = vmatprep.subr.mxu0 0.0
        %1073 = vmatpush1.msra.mxu0 0.0
        %1074 = vmatprep.subr.mxu0 0.0
        %1075 = vmatpush1.msra.mxu0 0.0
        %1076 = vmatprep.subr.mxu0 0.0
        %1077 = vmatpush1.msra.mxu0 0.0
        %1078 = vmatprep.subr.mxu0 0.0
        %1079 = vmatpush1.msra.mxu0 0.0
        %1080 = vmatprep.subr.mxu0 0.0
        %1081 = vmatpush1.msra.mxu0 0.0
        %1082 = vmatprep.subr.mxu0 0.0
        %1083 = vmatpush1.msra.mxu0 0.0
        %1084 = vmatprep.subr.mxu0 0.0
        %1085 = vmatpush1.msra.mxu0 0.0
        %1086 = vmatprep.mubr.f32.mxu0 0.0
        %1087 = vmatmul.mubr.f32.gmra.mrb[0].mxu0 %v1020
        %v1088 = vpop.f32.mrb[0].mxu0
        %v1089 = vadd.f32 %v1018, %v1088
        %v1090 = vpop.f32.mrb[0].mxu0
        %1091 = vdwg.mxu0
        %vm1092 = vcmask 24576
        %1093 = vst.msk [vmem:[%s517] sm:$0x1] %vm1092, %v1089
        %s1094 = sand.u32 %s326, 1
        %s1095 = scalar_lea.sflag [#allocation4], %s1094
        %s1096 = sand.u32 %s326, 1
        %s1097 = scalar_lea.vmem [#allocation11], %s1096
        // Predicated region
        $region93: #{basic_attn_forward.1} parent=71 // pred_check
          %p1098 = pneg %p336
        $region94: #{basic_attn_forward.1} parent=71 // pred_check_branch
          %1100 = sbr.rel (%p1098) target = $region96
        $region95: #{basic_attn_forward.1} parent=71 // pred_region
          %s1102 = ssub.s32 16, 16
          %1103 = vsyncadd %s1095, %s1102
          %s1104 = smul.addr %s30, 16
          %s1105 = scalar_lea.hbm %s13, %s1104
          %s1107 = sshll.u32 %s1097, 4
          %s1108 = int_to_ptr.vmem [resolvable:$true] %s1107
          %1110 = dma.vmem_to_hbm [thread:$0]  %s1108, 16, %s1105, %s1095
        $region96: #{basic_attn_forward.1} parent=71 // pred_fallthru
          _
      $region72: #{basic_attn_forward.1} parent=5 // pred_fallthru
        _
      %p1111 = scmp.le.s32.totalorder 2, %s25
      // Predicated region
      $region97: #{basic_attn_forward.1} parent=5 // pred_check
        %p1112 = pneg %p1111
      $region98: #{basic_attn_forward.1} parent=5 // pred_check_branch
        %1114 = sbr.rel (%p1112) target = $region100
      $region99: #{basic_attn_forward.1} parent=5 // pred_region
        %s1115 = ssub.s32 %s25, 2
        // Predicated region
        $region101: #{basic_attn_forward.1} parent=99 // pred_check
          %p1116 = pneg %p342
        $region102: #{basic_attn_forward.1} parent=99 // pred_check_branch
          %1118 = sbr.rel (%p1116) target = $region104
        $region103: #{basic_attn_forward.1} parent=99 // pred_region
          %s1119 = sand.u32 %s327, 1
          %s1120 = scalar_lea.sflag [#allocation4], %s1119
          %s1121 = sand.u32 %s327, 1
          %s1122 = scalar_lea.vmem [#allocation11], %s1121
          %1123 = dma.done %s1120, 16
        $region104: #{basic_attn_forward.1} parent=99 // pred_fallthru
          _
      $region100: #{basic_attn_forward.1} parent=5 // pred_fallthru
        _
    $region6: #{basic_attn_forward.1} parent=1 // loop_footer
      %s29 = sadd.s32 1, %s25
    $region7: #{basic_attn_forward.1} parent=1 // loop_footer_branch
      %24 = sbr.rel target = $region3
    $region8: #{basic_attn_forward.1} parent=1 // loop_exit
      _
    %1124 = vsyncpa [#allocation3], 1
    %s1125 = scalar_lea.sflag [#allocation3], 1
    %1126 = vsyncpa %s1125, 1
    %1127 = vsyncpa [#allocation6], 1
    %1128 = vsyncpa [#allocation9], 1
    %1129 = vsyncpa [#allocation4], 1
    %s1130 = scalar_lea.sflag [#allocation4], 1
    %1131 = vsyncpa %s1130, 1

</llo_original>
